<compile_context>
chip_gen: v5e
topology: v5e:2x2
jax: 0.10.0
libtpu: 0.0.40
codegen_flags: <defaults>
</compile_context>

<pallas_src>
import functools

import jax
import jax.numpy as jnp
from jax.experimental import pallas as pl
from jax.experimental.pallas import tpu as pltpu


# ----- synthetic PGConfig ----------------------------------------------------
class PGConfig:
    nfeatures = 16
    hidden_layer = [32, 32]
    init_std = 0.1


LANE = 128


def _round_up(n, m):
    return ((n + m - 1) // m) * m


def _cdiv(a, b):
    return (a + b - 1) // b


# ----- Pallas kernel ---------------------------------------------------------
def _mlp_softmax_kernel(n_layers, nactions, *refs):
    """Fused MLP: (Linear -> Tanh)* -> Linear -> Softmax(dim=1).

    refs = (x_ref, w0_ref, b0_ref, w1_ref, b1_ref, ..., out_ref)
    Hidden/output lane dims of the params are padded to 128; hidden padded
    lanes carry exact zeros, and the final layer's padded bias lanes carry
    -1e30 so the softmax sees exp(-1e30) == 0 with no in-kernel mask.
    """
    x_ref = refs[0]
    out_ref = refs[-1]
    param_refs = refs[1:-1]

    h = x_ref[...].astype(jnp.float32)
    for li in range(n_layers):
        w = param_refs[2 * li][...]
        b = param_refs[2 * li + 1][...]            # (1, out_pad) -> broadcasts
        h = jnp.dot(h, w, preferred_element_type=jnp.float32) + b
        if li < n_layers - 1:
            h = jnp.tanh(h)

    # Softmax over the action axis; padded lanes are -1e30 -> exp underflows
    # to exactly 0, so they affect neither the max nor the denominator.
    m = jnp.max(h, axis=-1, keepdims=True)
    e = jnp.exp(h - m)
    denom = jnp.sum(e, axis=-1, keepdims=True)
    probs = e * pl.reciprocal(denom, approx=False)

    # Narrow store: only the real action columns go back to HBM.
    out_ref[...] = probs[:, :nactions].astype(out_ref.dtype)


def pg_policy_forward(x, weights, biases, *, batch_tile=1024):
    """PGPolicyNetwork forward pass with a single fused Pallas kernel.

    x:       [B, nfeatures] float32
    weights: list of [in_i, out_i] float32
    biases:  list of [1, out_i] float32
    returns: [B, nactions] float32 (softmax probabilities, rows sum to 1)
    """
    B, F = x.shape
    n_layers = len(weights)
    nactions = weights[-1].shape[1]

    # --- pad only the hidden/output dims of the params to 128 lanes ---------
    # (x's feature dim stays at F; the MXU pads K internally.)
    in_dims = [F] + [_round_up(w.shape[1], LANE) for w in weights[:-1]]
    out_dims = [_round_up(w.shape[1], LANE) for w in weights]

    w_p, b_p = [], []
    for i, (w, b) in enumerate(zip(weights, biases)):
        w_p.append(
            jnp.pad(w, ((0, in_dims[i] - w.shape[0]), (0, out_dims[i] - w.shape[1])))
        )
        if i < n_layers - 1:
            # Hidden padded lanes must stay exactly 0 (tanh(0) = 0).
            b_p.append(jnp.pad(b, ((0, 0), (0, out_dims[i] - b.shape[1]))))
        else:
            # Final layer: bake the softmax mask into the padded bias lanes.
            b_p.append(
                jnp.pad(b, ((0, 0), (0, out_dims[i] - b.shape[1])),
                        constant_values=-1e30)
            )

    # --- batch tiling: big tiles, but guarantee grid >= 2 when possible -----
    b_aligned = _round_up(B, 8)
    half = max(8, _round_up(_cdiv(b_aligned, 2), 8))   # split batch across 2 TCs
    tile = max(8, min(_round_up(batch_tile, 8), half))
    grid = _cdiv(B, tile)                              # last block may be partial

    # --- compiler params -----------------------------------------------------
    compiler_kwargs = dict(dimension_semantics=("parallel",))
    if tile > 4096:
        # Large tiles need more scoped VMEM; stay well under v7x's 64 MiB
        # physical VMEM (and v5e/v6e's 128 MiB).
        compiler_kwargs["vmem_limit_bytes"] = 48 * 1024 * 1024

    # --- block specs: tile over batch; parameters resident (constant index) -
    in_specs = [pl.BlockSpec((tile, F), lambda i: (i, 0))]
    for li in range(n_layers):
        in_specs.append(pl.BlockSpec((in_dims[li], out_dims[li]), lambda i: (0, 0)))
        in_specs.append(pl.BlockSpec((1, out_dims[li]), lambda i: (0, 0)))
    out_spec = pl.BlockSpec((tile, nactions), lambda i: (i, 0))

    kernel = functools.partial(_mlp_softmax_kernel, n_layers, nactions)

    out = pl.pallas_call(
        kernel,
        out_shape=jax.ShapeDtypeStruct((B, nactions), jnp.float32),
        grid_spec=pltpu.PrefetchScalarGridSpec(
            num_scalar_prefetch=0,
            grid=(grid,),
            in_specs=in_specs,
            out_specs=out_spec,
        ),
        compiler_params=pltpu.CompilerParams(**compiler_kwargs),
    )(x, *[t for pair in zip(w_p, b_p) for t in pair])

    return out


# ----- parameter init (deterministic, mirrors _init_weights) -----------------
def init_params(key, layer_sizes, init_std):
    weights, biases = [], []
    for fan_in, fan_out in zip(layer_sizes[:-1], layer_sizes[1:]):
        key, kw, kb = jax.random.split(key, 3)
        # torch Linear.weight is [out, in]; store transposed [in, out] for x @ W.
        w = (jax.random.normal(kw, (fan_out, fan_in), jnp.float32) * init_std).T
        b = (jax.random.normal(kb, (fan_out,), jnp.float32) * init_std).reshape(1, fan_out)
        weights.append(jnp.asarray(w))
        biases.append(b)
    return weights, biases


# ----- pure-JAX reference for verification -----------------------------------
def reference_forward(x, weights, biases):
    h = x
    n = len(weights)
    for li, (w, b) in enumerate(zip(weights, biases)):
        h = h @ w + b
        if li < n - 1:
            h = jnp.tanh(h)
    return jax.nn.softmax(h, axis=1)


if __name__ == "__main__":
    nactions = 4
    layer_sizes = [PGConfig.nfeatures] + PGConfig.hidden_layer + [nactions]

    key = jax.random.PRNGKey(0)
    key, kx, kx2, kx3 = jax.random.split(key, 4)
    weights, biases = init_params(key, layer_sizes, PGConfig.init_std)

    # 1) Small batch: tile = 8, grid = 2 (exercises the megacore split path).
    B = 16
    x = jax.random.normal(kx, (B, PGConfig.nfeatures), jnp.float32)
    out = jax.block_until_ready(pg_policy_forward(x, weights, biases))
    ref = reference_forward(x, weights, biases)
    assert out.shape == (B, nactions)
    assert jnp.allclose(out, ref, atol=1e-5, rtol=1e-5), "mismatch vs reference (small B)"
    assert jnp.allclose(jnp.sum(out, axis=1), 1.0, atol=1e-5), "softmax rows must sum to 1"

    # 2) Explicit small tile: B=40, tile=16 -> grid=3 with a partial last block.
    B2 = 40
    x2 = jax.random.normal(kx2, (B2, PGConfig.nfeatures), jnp.float32)
    out2 = jax.block_until_ready(pg_policy_forward(x2, weights, biases, batch_tile=16))
    ref2 = reference_forward(x2, weights, biases)
    assert out2.shape == (B2, nactions)
    assert jnp.allclose(out2, ref2, atol=1e-5, rtol=1e-5), "mismatch vs reference (tiled B)"
    assert jnp.allclose(jnp.sum(out2, axis=1), 1.0, atol=1e-5), "softmax rows must sum to 1"

    # 3) Default tiling with a non-multiple batch: B=300 -> tile=152, grid=2,
    #    partial last block (OOB rows never written back).
    B3 = 300
    x3 = jax.random.normal(kx3, (B3, PGConfig.nfeatures), jnp.float32)
    out3 = jax.block_until_ready(pg_policy_forward(x3, weights, biases))
    ref3 = reference_forward(x3, weights, biases)
    assert out3.shape == (B3, nactions)
    assert jnp.allclose(out3, ref3, atol=1e-5, rtol=1e-5), "mismatch vs reference (default tile)"
    assert jnp.allclose(jnp.sum(out3, axis=1), 1.0, atol=1e-5), "softmax rows must sum to 1"

    print("KERNEL_OK")
</pallas_src>

<mosaic_0001>
module attributes {stable_mosaic.version = 11 : i64} {
  func.func @_mlp_softmax_kernel(%arg0: i32, %arg1: memref<8x16xf32, #tpu.memory_space<vmem>>, %arg2: memref<16x128xf32, #tpu.memory_space<vmem>>, %arg3: memref<1x128xf32, #tpu.memory_space<vmem>>, %arg4: memref<128x128xf32, #tpu.memory_space<vmem>>, %arg5: memref<1x128xf32, #tpu.memory_space<vmem>>, %arg6: memref<128x128xf32, #tpu.memory_space<vmem>>, %arg7: memref<1x128xf32, #tpu.memory_space<vmem>>, %arg8: memref<8x4xf32, #tpu.memory_space<vmem>>) attributes {dimension_semantics = [#tpu.dimension_semantics<parallel>], iteration_bounds = array<i64: 2>, scalar_prefetch = 0 : i64, scratch_operands = 0 : i64, tpu.core_type = #tpu.core_type<tc>, window_params = [{transform_indices = @transform_0, window_bounds = array<i64: 8, 16>}, {pipeline_mode = #tpu.pipeline_mode<synchronous>, transform_indices = @transform_1, window_bounds = array<i64: 16, 128>}, {pipeline_mode = #tpu.pipeline_mode<synchronous>, transform_indices = @transform_2, window_bounds = array<i64: 1, 128>}, {pipeline_mode = #tpu.pipeline_mode<synchronous>, transform_indices = @transform_3, window_bounds = array<i64: 128, 128>}, {pipeline_mode = #tpu.pipeline_mode<synchronous>, transform_indices = @transform_4, window_bounds = array<i64: 1, 128>}, {pipeline_mode = #tpu.pipeline_mode<synchronous>, transform_indices = @transform_5, window_bounds = array<i64: 128, 128>}, {pipeline_mode = #tpu.pipeline_mode<synchronous>, transform_indices = @transform_6, window_bounds = array<i64: 1, 128>}, {transform_indices = @transform_7, window_bounds = array<i64: 8, 4>}]} {
    %c0 = arith.constant 0 : index
    %c0_0 = arith.constant 0 : index
    %0 = vector.load %arg1[%c0, %c0_0] : memref<8x16xf32, #tpu.memory_space<vmem>>, vector<8x16xf32>
    %c0_1 = arith.constant 0 : index
    %c0_2 = arith.constant 0 : index
    %1 = vector.load %arg2[%c0_1, %c0_2] : memref<16x128xf32, #tpu.memory_space<vmem>>, vector<16x128xf32>
    %c0_3 = arith.constant 0 : index
    %c0_4 = arith.constant 0 : index
    %2 = vector.load %arg3[%c0_3, %c0_4] : memref<1x128xf32, #tpu.memory_space<vmem>>, vector<1x128xf32>
    %cst = arith.constant dense<0.000000e+00> : vector<8x128xf32>
    %3 = tpu.matmul %0, %1, %cst {dimension_numbers = #tpu.dot_dimension_numbers<[1], [0], [0], [1], [0, 0, 1, 1], [], []>} : vector<8x16xf32>, vector<16x128xf32>, vector<8x128xf32> -> vector<8x128xf32>
    %4 = vector.broadcast %2 : vector<1x128xf32> to vector<8x128xf32>
    %5 = arith.addf %3, %4 : vector<8x128xf32>
    %6 = math.tanh %5 : vector<8x128xf32>
    %c0_5 = arith.constant 0 : index
    %c0_6 = arith.constant 0 : index
    %7 = vector.load %arg4[%c0_5, %c0_6] : memref<128x128xf32, #tpu.memory_space<vmem>>, vector<128x128xf32>
    %c0_7 = arith.constant 0 : index
    %c0_8 = arith.constant 0 : index
    %8 = vector.load %arg5[%c0_7, %c0_8] : memref<1x128xf32, #tpu.memory_space<vmem>>, vector<1x128xf32>
    %cst_9 = arith.constant dense<0.000000e+00> : vector<8x128xf32>
    %9 = tpu.matmul %6, %7, %cst_9 {dimension_numbers = #tpu.dot_dimension_numbers<[1], [0], [0], [1], [0, 0, 1, 1], [], []>} : vector<8x128xf32>, vector<128x128xf32>, vector<8x128xf32> -> vector<8x128xf32>
    %10 = vector.broadcast %8 : vector<1x128xf32> to vector<8x128xf32>
    %11 = arith.addf %9, %10 : vector<8x128xf32>
    %12 = math.tanh %11 : vector<8x128xf32>
    %c0_10 = arith.constant 0 : index
    %c0_11 = arith.constant 0 : index
    %13 = vector.load %arg6[%c0_10, %c0_11] : memref<128x128xf32, #tpu.memory_space<vmem>>, vector<128x128xf32>
    %c0_12 = arith.constant 0 : index
    %c0_13 = arith.constant 0 : index
    %14 = vector.load %arg7[%c0_12, %c0_13] : memref<1x128xf32, #tpu.memory_space<vmem>>, vector<1x128xf32>
    %cst_14 = arith.constant dense<0.000000e+00> : vector<8x128xf32>
    %15 = tpu.matmul %12, %13, %cst_14 {dimension_numbers = #tpu.dot_dimension_numbers<[1], [0], [0], [1], [0, 0, 1, 1], [], []>} : vector<8x128xf32>, vector<128x128xf32>, vector<8x128xf32> -> vector<8x128xf32>
    %16 = vector.broadcast %14 : vector<1x128xf32> to vector<8x128xf32>
    %17 = arith.addf %15, %16 : vector<8x128xf32>
    %cst_15 = arith.constant dense<0xFF800000> : vector<8xf32>
    %18 = vector.multi_reduction <maximumf>, %17, %cst_15 [1] : vector<8x128xf32> to vector<8xf32>
    %19 = vector.shape_cast %18 : vector<8xf32> to vector<8x1xf32>
    %20 = vector.broadcast %19 : vector<8x1xf32> to vector<8x128xf32>
    %21 = arith.subf %17, %20 : vector<8x128xf32>
    %22 = math.exp %21 : vector<8x128xf32>
    %cst_16 = arith.constant dense<0.000000e+00> : vector<8xf32>
    %23 = vector.multi_reduction <add>, %22, %cst_16 [1] : vector<8x128xf32> to vector<8xf32>
    %24 = vector.shape_cast %23 : vector<8xf32> to vector<8x1xf32>
    %25 = tpu.reciprocal %24 : vector<8x1xf32> -> vector<8x1xf32>
    %26 = vector.broadcast %25 : vector<8x1xf32> to vector<8x128xf32>
    %27 = arith.mulf %22, %26 : vector<8x128xf32>
    %28 = vector.extract_strided_slice %27 {offsets = [0, 0], sizes = [8, 4], strides = [1, 1]} : vector<8x128xf32> to vector<8x4xf32>
    %c0_17 = arith.constant 0 : index
    %c0_18 = arith.constant 0 : index
    %29 = vector.load %arg8[%c0_17, %c0_18] : memref<8x4xf32, #tpu.memory_space<vmem>>, vector<8x4xf32>
    tpu.vector_store %arg8[%c0_17, %c0_18], %28 {strides = array<i32>} : memref<8x4xf32, #tpu.memory_space<vmem>>, vector<8x4xf32>,
    return
  }
  func.func @transform_0(%arg0: i32) -> (i32, i32) {
    %c0_i32 = arith.constant 0 : i32
    %c0_i32_0 = arith.constant 0 : i32
    return %arg0, %c0_i32 : i32, i32
  }
  func.func @transform_1(%arg0: i32) -> (i32, i32) {
    %c0_i32 = arith.constant 0 : i32
    %c0_i32_0 = arith.constant 0 : i32
    %c0_i32_1 = arith.constant 0 : i32
    return %c0_i32, %c0_i32_0 : i32, i32
  }
  func.func @transform_2(%arg0: i32) -> (i32, i32) {
    %c0_i32 = arith.constant 0 : i32
    %c0_i32_0 = arith.constant 0 : i32
    %c0_i32_1 = arith.constant 0 : i32
    return %c0_i32, %c0_i32_0 : i32, i32
  }
  func.func @transform_3(%arg0: i32) -> (i32, i32) {
    %c0_i32 = arith.constant 0 : i32
    %c0_i32_0 = arith.constant 0 : i32
    %c0_i32_1 = arith.constant 0 : i32
    return %c0_i32, %c0_i32_0 : i32, i32
  }
  func.func @transform_4(%arg0: i32) -> (i32, i32) {
    %c0_i32 = arith.constant 0 : i32
    %c0_i32_0 = arith.constant 0 : i32
    %c0_i32_1 = arith.constant 0 : i32
    return %c0_i32, %c0_i32_0 : i32, i32
  }
  func.func @transform_5(%arg0: i32) -> (i32, i32) {
    %c0_i32 = arith.constant 0 : i32
    %c0_i32_0 = arith.constant 0 : i32
    %c0_i32_1 = arith.constant 0 : i32
    return %c0_i32, %c0_i32_0 : i32, i32
  }
  func.func @transform_6(%arg0: i32) -> (i32, i32) {
    %c0_i32 = arith.constant 0 : i32
    %c0_i32_0 = arith.constant 0 : i32
    %c0_i32_1 = arith.constant 0 : i32
    return %c0_i32, %c0_i32_0 : i32, i32
  }
  func.func @transform_7(%arg0: i32) -> (i32, i32) {
    %c0_i32 = arith.constant 0 : i32
    %c0_i32_0 = arith.constant 0 : i32
    return %arg0, %c0_i32 : i32, i32
  }
}

</mosaic_0001>

<llo_original>
// kernel: tpu_custom_call.1
$region0: #{tpu_custom_call.1}
  #allocation0 [shape = 'u32[]', space=smem, size = 0x4, offset = 0x4, fixed_abs, tag = 'smem constant byte address 0x4 - core index']
  #allocation1 [shape = 'u32[72,128]{1,0:T(1,128)}', space=vmem, size = 0x9000, scoped, tag = 'internal scratch']
  %s0 = inlined_call_operand.hbm [shape: f32[16,16], index: 0, kind: input, shape index: {}]
  %s1 = inlined_call_operand.hbm [shape: f32[16,128], index: 1, kind: input, shape index: {}]
  %s2 = inlined_call_operand.vmem [shape: f32[1,128], index: 2, kind: input, shape index: {}]
  %s3 = inlined_call_operand.hbm [shape: f32[128,128], index: 3, kind: input, shape index: {}]
  %s4 = inlined_call_operand.vmem [shape: f32[1,128], index: 4, kind: input, shape index: {}]
  %s5 = inlined_call_operand.hbm [shape: f32[128,128], index: 5, kind: input, shape index: {}]
  %s6 = inlined_call_operand.vmem [shape: f32[1,128], index: 6, kind: input, shape index: {}]
  %s7 = inlined_call_operand.vmem [shape: f32[16,4], index: 7, kind: output, shape index: {}]
  %s8 = sld [smem:[#allocation0]]
  $region77: #{tpu_custom_call.1} parent=0
    _
  %s10 = ssub.s32 1, %s8
  %s11 = scalar_select 0, %s10, %s8
  $region1: #{tpu_custom_call.1} parent=0
    #allocation2 [shape = 'u8[8192]{0}', space=vmem, size = 0x2000, scoped, tag = 'input window, operand 0']
    #allocation3 [shape = 's32[2]{0}', space=sflag, size = 0x8, scoped, tag = 'scoped memory for tpu_custom_call.1']
    #allocation4 [shape = 'u8[8192]{0}', space=vmem, size = 0x2000, scoped, tag = 'input window, operand 1, single buffered']
    #allocation5 [shape = 's32[1]{0}', space=sflag, size = 0x4, scoped, tag = 'scoped memory for tpu_custom_call.1']
    #allocation6 [shape = 'u8[65536]{0}', space=vmem, size = 0x10000, scoped, tag = 'input window, operand 3, single buffered']
    #allocation7 [shape = 'u8[65536]{0}', space=vmem, size = 0x10000, scoped, tag = 'input window, operand 5, single buffered']
    #allocation8 [shape = 's32[1]{0}', space=sflag, size = 0x4, scoped, tag = 'scoped memory for tpu_custom_call.1']
    %12 = vsyncpa [#allocation3], 0
    %s13 = scalar_lea.sflag [#allocation3], 1
    %14 = vsyncpa %s13, 0
    %15 = vsyncpa [#allocation5], 0
    %16 = vsyncpa [#allocation8], 0
    loop: start=0, step=1, limit=4
    $region2: #{tpu_custom_call.1} parent=1 // loop_pre_header
      _
    $region3: #{tpu_custom_call.1} parent=1 // loop_header
      %s18 = sphi 0, %s22
      %p19 = scmp.ge.s32.totalorder %s18, 4
      %s28 = sphi 0, %s30
      %s31 = sphi 0, %s28
      %s32 = sphi 0, %s31
      %s48 = sphi 0, %s32
      %s52 = sphi 0, %s52
      %s54 = sphi 0, %s52
      %s55 = sphi 0, %s54
      %s69 = sphi 0, %s55
      %s73 = sphi 0, %s73
      %s75 = sphi 0, %s73
      %s76 = sphi 0, %s75
      %s90 = sphi 0, %s76
      %s94 = sphi 0, %s94
      %s96 = sphi 0, %s94
      %s97 = sphi 0, %s96
      %s111 = sphi 0, %s97
      %s115 = sphi 0, %s115
      %s117 = sphi 0, %s115
      %s118 = sphi 0, %s117
      %s132 = sphi 0, %s118
      %s136 = sphi 0, %s136
      %s138 = sphi 0, %s136
      %s139 = sphi 0, %s138
      %s153 = sphi 0, %s139
      %s157 = sphi 0, %s157
      %s159 = sphi 0, %s157
      %s160 = sphi 0, %s159
      %s174 = sphi 0, %s160
      %s180 = sphi 0, %s182
      %s183 = sphi 0, %s180
      %s184 = sphi 0, %s183
      %s200 = sphi 0, %s184
    $region4: #{tpu_custom_call.1} parent=1 // loop_header_branch
      %21 = sbr.rel (%p19) target = $region8
    $region5: #{tpu_custom_call.1} parent=1 // loop_body
      %s23 = ssub.s32 %s18, 1
      %s24 = ssub.s32 %s18, 2
      %s25 = sadd.s32 %s18, 1
      %s26 = ssub.s32 %s18, %s25
      %p27 = scmp.eq.s32.totalorder %s26, 0
      %s29 = sadd.s32 %s28, 1
      %s30 = scalar_select %p27, %s28, %s29
      %p33 = pneg %p27
      %p34 = scmp.eq.s32.totalorder %s18, 1
      %p35 = por %p33, %p34
      %p36 = scmp.ne.s32.totalorder %s28, %s31
      %p37 = scmp.eq.s32.totalorder %s18, 0
      %p38 = por %p36, %p37
      %p39 = scmp.ne.s32.totalorder %s28, %s31
      %p40 = scmp.eq.s32.totalorder %s23, 1
      %p41 = por %p39, %p40
      %p42 = scmp.ne.s32.totalorder %s31, %s32
      %p43 = scmp.eq.s32.totalorder %s23, 0
      %p44 = por %p42, %p43
      %p45 = scmp.ne.s32.totalorder %s31, %s32
      %p46 = scmp.eq.s32.totalorder %s24, 1
      %p47 = por %p45, %p46
      %p49 = scmp.ne.s32.totalorder %s32, %s48
      %p50 = scmp.eq.s32.totalorder %s24, 0
      %p51 = por %p49, %p50
      %s53 = sadd.s32 %s52, 1
      %p56 = scmp.eq.s32.totalorder %s18, 1
      %p57 = scmp.ne.s32.totalorder %s52, %s54
      %p58 = scmp.eq.s32.totalorder %s18, 0
      %p59 = por %p57, %p58
      %p60 = scmp.ne.s32.totalorder %s52, %s54
      %p61 = scmp.eq.s32.totalorder %s23, 1
      %p62 = por %p60, %p61
      %p63 = scmp.ne.s32.totalorder %s54, %s55
      %p64 = scmp.eq.s32.totalorder %s23, 0
      %p65 = por %p63, %p64
      %p66 = scmp.ne.s32.totalorder %s54, %s55
      %p67 = scmp.eq.s32.totalorder %s24, 1
      %p68 = por %p66, %p67
      %p70 = scmp.ne.s32.totalorder %s55, %s69
      %p71 = scmp.eq.s32.totalorder %s24, 0
      %p72 = por %p70, %p71
      %s74 = sadd.s32 %s73, 1
      %p77 = scmp.eq.s32.totalorder %s18, 1
      %p78 = scmp.ne.s32.totalorder %s73, %s75
      %p79 = scmp.eq.s32.totalorder %s18, 0
      %p80 = por %p78, %p79
      %p81 = scmp.ne.s32.totalorder %s73, %s75
      %p82 = scmp.eq.s32.totalorder %s23, 1
      %p83 = por %p81, %p82
      %p84 = scmp.ne.s32.totalorder %s75, %s76
      %p85 = scmp.eq.s32.totalorder %s23, 0
      %p86 = por %p84, %p85
      %p87 = scmp.ne.s32.totalorder %s75, %s76
      %p88 = scmp.eq.s32.totalorder %s24, 1
      %p89 = por %p87, %p88
      %p91 = scmp.ne.s32.totalorder %s76, %s90
      %p92 = scmp.eq.s32.totalorder %s24, 0
      %p93 = por %p91, %p92
      %s95 = sadd.s32 %s94, 1
      %p98 = scmp.eq.s32.totalorder %s18, 1
      %p99 = scmp.ne.s32.totalorder %s94, %s96
      %p100 = scmp.eq.s32.totalorder %s18, 0
      %p101 = por %p99, %p100
      %p102 = scmp.ne.s32.totalorder %s94, %s96
      %p103 = scmp.eq.s32.totalorder %s23, 1
      %p104 = por %p102, %p103
      %p105 = scmp.ne.s32.totalorder %s96, %s97
      %p106 = scmp.eq.s32.totalorder %s23, 0
      %p107 = por %p105, %p106
      %p108 = scmp.ne.s32.totalorder %s96, %s97
      %p109 = scmp.eq.s32.totalorder %s24, 1
      %p110 = por %p108, %p109
      %p112 = scmp.ne.s32.totalorder %s97, %s111
      %p113 = scmp.eq.s32.totalorder %s24, 0
      %p114 = por %p112, %p113
      %s116 = sadd.s32 %s115, 1
      %p119 = scmp.eq.s32.totalorder %s18, 1
      %p120 = scmp.ne.s32.totalorder %s115, %s117
      %p121 = scmp.eq.s32.totalorder %s18, 0
      %p122 = por %p120, %p121
      %p123 = scmp.ne.s32.totalorder %s115, %s117
      %p124 = scmp.eq.s32.totalorder %s23, 1
      %p125 = por %p123, %p124
      %p126 = scmp.ne.s32.totalorder %s117, %s118
      %p127 = scmp.eq.s32.totalorder %s23, 0
      %p128 = por %p126, %p127
      %p129 = scmp.ne.s32.totalorder %s117, %s118
      %p130 = scmp.eq.s32.totalorder %s24, 1
      %p131 = por %p129, %p130
      %p133 = scmp.ne.s32.totalorder %s118, %s132
      %p134 = scmp.eq.s32.totalorder %s24, 0
      %p135 = por %p133, %p134
      %s137 = sadd.s32 %s136, 1
      %p140 = scmp.eq.s32.totalorder %s18, 1
      %p141 = scmp.ne.s32.totalorder %s136, %s138
      %p142 = scmp.eq.s32.totalorder %s18, 0
      %p143 = por %p141, %p142
      %p144 = scmp.ne.s32.totalorder %s136, %s138
      %p145 = scmp.eq.s32.totalorder %s23, 1
      %p146 = por %p144, %p145
      %p147 = scmp.ne.s32.totalorder %s138, %s139
      %p148 = scmp.eq.s32.totalorder %s23, 0
      %p149 = por %p147, %p148
      %p150 = scmp.ne.s32.totalorder %s138, %s139
      %p151 = scmp.eq.s32.totalorder %s24, 1
      %p152 = por %p150, %p151
      %p154 = scmp.ne.s32.totalorder %s139, %s153
      %p155 = scmp.eq.s32.totalorder %s24, 0
      %p156 = por %p154, %p155
      %s158 = sadd.s32 %s157, 1
      %p161 = scmp.eq.s32.totalorder %s18, 1
      %p162 = scmp.ne.s32.totalorder %s157, %s159
      %p163 = scmp.eq.s32.totalorder %s18, 0
      %p164 = por %p162, %p163
      %p165 = scmp.ne.s32.totalorder %s157, %s159
      %p166 = scmp.eq.s32.totalorder %s23, 1
      %p167 = por %p165, %p166
      %p168 = scmp.ne.s32.totalorder %s159, %s160
      %p169 = scmp.eq.s32.totalorder %s23, 0
      %p170 = por %p168, %p169
      %p171 = scmp.ne.s32.totalorder %s159, %s160
      %p172 = scmp.eq.s32.totalorder %s24, 1
      %p173 = por %p171, %p172
      %p175 = scmp.ne.s32.totalorder %s160, %s174
      %p176 = scmp.eq.s32.totalorder %s24, 0
      %p177 = por %p175, %p176
      %s178 = ssub.s32 %s18, %s25
      %p179 = scmp.eq.s32.totalorder %s178, 0
      %s181 = sadd.s32 %s180, 1
      %s182 = scalar_select %p179, %s180, %s181
      %p185 = pneg %p179
      %p186 = scmp.eq.s32.totalorder %s18, 1
      %p187 = por %p185, %p186
      %p188 = scmp.ne.s32.totalorder %s180, %s183
      %p189 = scmp.eq.s32.totalorder %s18, 0
      %p190 = por %p188, %p189
      %p191 = scmp.ne.s32.totalorder %s180, %s183
      %p192 = scmp.eq.s32.totalorder %s23, 1
      %p193 = por %p191, %p192
      %p194 = scmp.ne.s32.totalorder %s183, %s184
      %p195 = scmp.eq.s32.totalorder %s23, 0
      %p196 = por %p194, %p195
      %p197 = scmp.ne.s32.totalorder %s183, %s184
      %p198 = scmp.eq.s32.totalorder %s24, 1
      %p199 = por %p197, %p198
      %p201 = scmp.ne.s32.totalorder %s184, %s200
      %p202 = scmp.eq.s32.totalorder %s24, 0
      %p203 = por %p201, %p202
      %p204 = scmp.le.s32.totalorder 1, %s18
      %p205 = scmp.lt.s32.totalorder %s18, 3
      %p206 = pnand %p204, %p205
      %p207 = pneg %p206
      // Predicated region
      $region9: #{tpu_custom_call.1} parent=5 // pred_check
        _
      $region10: #{tpu_custom_call.1} parent=5 // pred_check_branch
        %209 = sbr.rel (%p206) target = $region12
      $region11: #{tpu_custom_call.1} parent=5 // pred_region
        %s210 = ssub.s32 %s18, 1
        // Predicated region
        $region13: #{tpu_custom_call.1} parent=11 // pred_check
          %p211 = pneg %p65
        $region14: #{tpu_custom_call.1} parent=11 // pred_check_branch
          %213 = sbr.rel (%p211) target = $region16
        $region15: #{tpu_custom_call.1} parent=11 // pred_region
          %215 = vsyncadd [#allocation5], 0
          %s216 = sshll.u32 %s1, 4
          %s217 = int_to_ptr.hbm [resolvable:$true] %s216
          %s218 = sshll.u32 [#allocation4], 4
          %s219 = int_to_ptr.vmem [resolvable:$true] %s218
          %224 = dma.hbm_to_vmem [thread:$0]  %s217, 256, %s219, [#allocation5], 128, 128, 8
        $region16: #{tpu_custom_call.1} parent=11 // pred_fallthru
          _
        // Predicated region
        $region17: #{tpu_custom_call.1} parent=11 // pred_check
          %p225 = pneg %p86
        $region18: #{tpu_custom_call.1} parent=11 // pred_check_branch
          %227 = sbr.rel (%p225) target = $region20
        $region19: #{tpu_custom_call.1} parent=11 // pred_region
          _
        $region20: #{tpu_custom_call.1} parent=11 // pred_fallthru
          _
        // Predicated region
        $region21: #{tpu_custom_call.1} parent=11 // pred_check
          %p228 = pneg %p107
        $region22: #{tpu_custom_call.1} parent=11 // pred_check_branch
          %230 = sbr.rel (%p228) target = $region24
        $region23: #{tpu_custom_call.1} parent=11 // pred_region
          %232 = vsyncadd [#allocation5], 0
          %s233 = sshll.u32 %s3, 4
          %s234 = int_to_ptr.hbm [resolvable:$true] %s233
          %s235 = sshll.u32 [#allocation6], 4
          %s236 = int_to_ptr.vmem [resolvable:$true] %s235
          %241 = dma.hbm_to_vmem [thread:$0]  %s234, 2048, %s236, [#allocation5], 128, 128, 8
        $region24: #{tpu_custom_call.1} parent=11 // pred_fallthru
          _
        // Predicated region
        $region25: #{tpu_custom_call.1} parent=11 // pred_check
          %p242 = pneg %p128
        $region26: #{tpu_custom_call.1} parent=11 // pred_check_branch
          %244 = sbr.rel (%p242) target = $region28
        $region27: #{tpu_custom_call.1} parent=11 // pred_region
          _
        $region28: #{tpu_custom_call.1} parent=11 // pred_fallthru
          _
        // Predicated region
        $region29: #{tpu_custom_call.1} parent=11 // pred_check
          %p245 = pneg %p149
        $region30: #{tpu_custom_call.1} parent=11 // pred_check_branch
          %247 = sbr.rel (%p245) target = $region32
        $region31: #{tpu_custom_call.1} parent=11 // pred_region
          %249 = vsyncadd [#allocation8], 0
          %s250 = sshll.u32 %s5, 4
          %s251 = int_to_ptr.hbm [resolvable:$true] %s250
          %s252 = sshll.u32 [#allocation7], 4
          %s253 = int_to_ptr.vmem [resolvable:$true] %s252
          %258 = dma.hbm_to_vmem [thread:$0]  %s251, 2048, %s253, [#allocation8], 128, 128, 8
        $region32: #{tpu_custom_call.1} parent=11 // pred_fallthru
          _
        // Predicated region
        $region33: #{tpu_custom_call.1} parent=11 // pred_check
          %p259 = pneg %p170
        $region34: #{tpu_custom_call.1} parent=11 // pred_check_branch
          %261 = sbr.rel (%p259) target = $region36
        $region35: #{tpu_custom_call.1} parent=11 // pred_region
          _
        $region36: #{tpu_custom_call.1} parent=11 // pred_fallthru
          _
      $region12: #{tpu_custom_call.1} parent=5 // pred_fallthru
        _
      %p262 = scmp.lt.s32.totalorder %s18, 2
      // Predicated region
      $region37: #{tpu_custom_call.1} parent=5 // pred_check
        %p263 = pneg %p262
      $region38: #{tpu_custom_call.1} parent=5 // pred_check_branch
        %265 = sbr.rel (%p263) target = $region40
      $region39: #{tpu_custom_call.1} parent=5 // pred_region
        // Predicated region
        $region41: #{tpu_custom_call.1} parent=39 // pred_check
          %p266 = pneg %p38
        $region42: #{tpu_custom_call.1} parent=39 // pred_check_branch
          %268 = sbr.rel (%p266) target = $region44
        $region43: #{tpu_custom_call.1} parent=39 // pred_region
          %s269 = sand.u32 %s28, 1
          %s270 = scalar_lea.sflag [#allocation3], %s269
          %s271 = sand.u32 %s28, 1
          %s272 = smul.addr %s271, 8
          %s273 = scalar_lea.vmem [#allocation2], %s272
          %275 = vsyncadd %s270, 0
          %s276 = smul.addr %s18, 8
          %s277 = scalar_lea.hbm %s0, %s276
          %s279 = sshll.u32 %s277, 4
          %s280 = int_to_ptr.hbm [resolvable:$true] %s279
          %s281 = sshll.u32 %s273, 4
          %s282 = int_to_ptr.vmem [resolvable:$true] %s281
          %284 = dma.hbm_to_vmem [thread:$0]  %s280, 128, %s282, %s270
        $region44: #{tpu_custom_call.1} parent=39 // pred_fallthru
          _
      $region40: #{tpu_custom_call.1} parent=5 // pred_fallthru
        _
      %p285 = scmp.le.s32.totalorder 1, %s18
      %p286 = scmp.lt.s32.totalorder %s18, 3
      %p287 = pnand %p285, %p286
      %p288 = pneg %p287
      // Predicated region
      $region45: #{tpu_custom_call.1} parent=5 // pred_check
        _
      $region46: #{tpu_custom_call.1} parent=5 // pred_check_branch
        %290 = sbr.rel (%p287) target = $region48
      $region47: #{tpu_custom_call.1} parent=5 // pred_region
        %s291 = ssub.s32 %s18, 1
        %s292 = sand.u32 %s31, 1
        %s293 = scalar_lea.sflag [#allocation3], %s292
        %s294 = sand.u32 %s31, 1
        %s295 = smul.addr %s294, 8
        %s296 = scalar_lea.vmem [#allocation2], %s295
        // Predicated region
        $region49: #{tpu_custom_call.1} parent=47 // pred_check
          %p297 = pneg %p44
        $region50: #{tpu_custom_call.1} parent=47 // pred_check_branch
          %299 = sbr.rel (%p297) target = $region52
        $region51: #{tpu_custom_call.1} parent=47 // pred_region
          %301 = dma.done %s293, 128
        $region52: #{tpu_custom_call.1} parent=47 // pred_fallthru
          _
        // Predicated region
        $region53: #{tpu_custom_call.1} parent=47 // pred_check
          %p302 = pneg %p65
        $region54: #{tpu_custom_call.1} parent=47 // pred_check_branch
          %304 = sbr.rel (%p302) target = $region56
        $region55: #{tpu_custom_call.1} parent=47 // pred_region
          %306 = dma.done [#allocation5], 256
        $region56: #{tpu_custom_call.1} parent=47 // pred_fallthru
          _
        // Predicated region
        $region57: #{tpu_custom_call.1} parent=47 // pred_check
          %p307 = pneg %p107
        $region58: #{tpu_custom_call.1} parent=47 // pred_check_branch
          %309 = sbr.rel (%p307) target = $region60
        $region59: #{tpu_custom_call.1} parent=47 // pred_region
          %311 = dma.done [#allocation5], 2048
        $region60: #{tpu_custom_call.1} parent=47 // pred_fallthru
          _
        // Predicated region
        $region61: #{tpu_custom_call.1} parent=47 // pred_check
          %p312 = pneg %p149
        $region62: #{tpu_custom_call.1} parent=47 // pred_check_branch
          %314 = sbr.rel (%p312) target = $region64
        $region63: #{tpu_custom_call.1} parent=47 // pred_region
          %316 = dma.done [#allocation8], 2048
        $region64: #{tpu_custom_call.1} parent=47 // pred_fallthru
          _
        %s317 = sand.u32 %s31, 1
        %s318 = scalar_lea.sflag [#allocation3], %s317
        %s319 = sand.u32 %s31, 1
        %s320 = smul.addr %s319, 8
        %s321 = scalar_lea.vmem [#allocation2], %s320
        %p322 = pneg %p44
        %p323 = pneg %p41
        %p324 = pneg %p65
        %p325 = pneg %p62
        %p326 = pneg %p86
        %p327 = pneg %p83
        %p328 = pneg %p107
        %p329 = pneg %p104
        %p330 = pneg %p128
        %p331 = pneg %p125
        %p332 = pneg %p149
        %p333 = pneg %p146
        %p334 = pneg %p170
        %p335 = pneg %p167
        %p336 = pneg %p196
        %p337 = pneg %p193
        %p338 = scmp.lt.s32.totalorder %s23, 1
        %s339 = scalar_select %p338, %s23, 1
        %s340 = smul.addr %s339, 8
        %s341 = scalar_lea.vmem %s7, %s340
        %p342 = scmp.lt.s32.totalorder %s23, 1
        %s343 = scalar_select %p342, %s23, 1
        %s344 = smul.addr %s343, 8
        %s345 = scalar_lea.vmem %s7, %s344
        %v346 = vld [vmem:[%s296] sm:$0xff]
        %v347 = vld [vmem:[#allocation4] sm:$0xff]
        %v348 = vld [vmem:[#allocation4 + $0x8] sm:$0xff]
        %v349 = vld [vmem:[%s2] sm:$0x1]
        %v351 = vperm.slane %v349, 0
        %vm353 = vcmask 130048
        %v355 = vsel %vm353, %v346, 0
        %357 = vmatpush.msra.mxu0 0.0
        %358 = vmatpush.msra.mxu0 0.0
        %359 = vmatpush.msra.mxu0 0.0
        %360 = vmatpush.msra.mxu0 0.0
        %361 = vmatpush.msra.mxu0 0.0
        %362 = vmatpush.msra.mxu0 0.0
        %363 = vmatpush.msra.mxu0 0.0
        %364 = vmatpush.msra.mxu0 0.0
        %365 = vmatpush.msra.mxu0 0.0
        %366 = vmatpush.msra.mxu0 0.0
        %367 = vmatpush.msra.mxu0 0.0
        %368 = vmatpush.msra.mxu0 0.0
        %369 = vmatpush.msra.mxu0 0.0
        %370 = vmatpush.msra.mxu0 0.0
        %371 = vmatpush.msra.mxu0 %v348
        %372 = vmatpush.msra.mxu0 %v347
        %373 = vmatmul.f32.gmra.mxu0 %v355
        %v374 = vpop.f32.mrf.mxu0
        %v375 = vadd.f32 %v351, %v374
        %376 = vdwg.mxu0
        %v377 = vtanh.pop %v375
        %v378 = vld [vmem:[#allocation6] sm:$0xff]
        %v379 = vld [vmem:[#allocation6 + $0x8] sm:$0xff]
        %v380 = vld [vmem:[#allocation6 + $0x10] sm:$0xff]
        %v381 = vld [vmem:[#allocation6 + $0x18] sm:$0xff]
        %v382 = vld [vmem:[#allocation6 + $0x20] sm:$0xff]
        %v383 = vld [vmem:[#allocation6 + $0x28] sm:$0xff]
        %v384 = vld [vmem:[#allocation6 + $0x30] sm:$0xff]
        %v385 = vld [vmem:[#allocation6 + $0x38] sm:$0xff]
        %v386 = vld [vmem:[#allocation6 + $0x40] sm:$0xff]
        %v387 = vld [vmem:[#allocation6 + $0x48] sm:$0xff]
        %v388 = vld [vmem:[#allocation6 + $0x50] sm:$0xff]
        %v389 = vld [vmem:[#allocation6 + $0x58] sm:$0xff]
        %v390 = vld [vmem:[#allocation6 + $0x60] sm:$0xff]
        %v391 = vld [vmem:[#allocation6 + $0x68] sm:$0xff]
        %v392 = vld [vmem:[#allocation6 + $0x70] sm:$0xff]
        %v393 = vld [vmem:[#allocation6 + $0x78] sm:$0xff]
        %v394 = vld [vmem:[%s4] sm:$0x1]
        %v396 = vperm.slane %v394, 0
        %398 = vmatpush.msra.mxu0 %v393
        %399 = vmatpush.msra.mxu0 %v392
        %400 = vmatpush.msra.mxu0 %v391
        %401 = vmatpush.msra.mxu0 %v390
        %402 = vmatpush.msra.mxu0 %v389
        %403 = vmatpush.msra.mxu0 %v388
        %404 = vmatpush.msra.mxu0 %v387
        %405 = vmatpush.msra.mxu0 %v386
        %406 = vmatpush.msra.mxu0 %v385
        %407 = vmatpush.msra.mxu0 %v384
        %408 = vmatpush.msra.mxu0 %v383
        %409 = vmatpush.msra.mxu0 %v382
        %410 = vmatpush.msra.mxu0 %v381
        %411 = vmatpush.msra.mxu0 %v380
        %412 = vmatpush.msra.mxu0 %v379
        %413 = vmatpush.msra.mxu0 %v378
        %414 = vmatmul.f32.gmra.mxu0 %v377
        %v415 = vpop.f32.mrf.mxu0
        %v416 = vadd.f32 %v396, %v415
        %417 = vdwg.mxu0
        %v418 = vtanh.pop %v416
        %v419 = vld [vmem:[#allocation7] sm:$0xff]
        %v420 = vld [vmem:[#allocation7 + $0x8] sm:$0xff]
        %v421 = vld [vmem:[#allocation7 + $0x10] sm:$0xff]
        %v422 = vld [vmem:[#allocation7 + $0x18] sm:$0xff]
        %v423 = vld [vmem:[#allocation7 + $0x20] sm:$0xff]
        %v424 = vld [vmem:[#allocation7 + $0x28] sm:$0xff]
        %v425 = vld [vmem:[#allocation7 + $0x30] sm:$0xff]
        %v426 = vld [vmem:[#allocation7 + $0x38] sm:$0xff]
        %v427 = vld [vmem:[#allocation7 + $0x40] sm:$0xff]
        %v428 = vld [vmem:[#allocation7 + $0x48] sm:$0xff]
        %v429 = vld [vmem:[#allocation7 + $0x50] sm:$0xff]
        %v430 = vld [vmem:[#allocation7 + $0x58] sm:$0xff]
        %v431 = vld [vmem:[#allocation7 + $0x60] sm:$0xff]
        %v432 = vld [vmem:[#allocation7 + $0x68] sm:$0xff]
        %v433 = vld [vmem:[#allocation7 + $0x70] sm:$0xff]
        %v434 = vld [vmem:[#allocation7 + $0x78] sm:$0xff]
        %v435 = vld [vmem:[%s6] sm:$0x1]
        %v437 = vperm.slane %v435, 0
        %439 = vmatpush.msra.mxu0 %v434
        %440 = vmatpush.msra.mxu0 %v433
        %441 = vmatpush.msra.mxu0 %v432
        %442 = vmatpush.msra.mxu0 %v431
        %443 = vmatpush.msra.mxu0 %v430
        %444 = vmatpush.msra.mxu0 %v429
        %445 = vmatpush.msra.mxu0 %v428
        %446 = vmatpush.msra.mxu0 %v427
        %447 = vmatpush.msra.mxu0 %v426
        %448 = vmatpush.msra.mxu0 %v425
        %449 = vmatpush.msra.mxu0 %v424
        %450 = vmatpush.msra.mxu0 %v423
        %451 = vmatpush.msra.mxu0 %v422
        %452 = vmatpush.msra.mxu0 %v421
        %453 = vmatpush.msra.mxu0 %v420
        %454 = vmatpush.msra.mxu0 %v419
        %455 = vmatmul.f32.gmra.mxu0 %v418
        %v456 = vpop.f32.mrf.mxu0
        %v457 = vadd.f32 %v437, %v456
        %458 = vdwg.mxu0
        %459 = vmax.xlane.f32.xlu0 %v457
        %v460 = vpop.xlane.xlu0 %459
        %v461 = vsub.f32 %v457, %v460
        %v462 = vmul.f32 %v461, 1.442695
        %v463 = vpow.pop %v462
        %464 = vadd.xlane.f32.xlu0 %v463
        %v465 = vpop.xlane.xlu0 %464
        %v466 = vrcp.pop %v465
        %v467 = vmul.f32 %v465, %v466
        %v468 = vsub.f32 1.0, %v467
        %v469 = vmul.f32 %v466, %v468
        %v470 = vadd.f32 %v466, %v469
        %vm471 = vweird.f32 %v465
        %vm472 = vweird.f32 %v466
        %vm473 = vmor %vm471, %vm472
        %v474 = vsel %vm473, %v466, %v470
        %v475 = vand.u32 2147483647, %v465
        %vm476 = vcmp.eq.f32.partialorder %v475, 8.507059e+37
        %v477 = vand.u32 %v465, 2147483648
        %v478 = vor.u32 1.1754944e-38, %v477
        %v479 = vsel %vm476, %v478, %v474
        %v480 = vmul.f32 %v463, %v479
        %vm481 = vcmask 31744
        %482 = vst.msk [vmem:[%s345] sm:$0xff] %vm481, %v480
        %p483 = scmp.lt.s32.totalorder %s23, 1
        %s484 = scalar_select %p483, %s23, 1
        %s485 = smul.addr %s484, 8
        %s486 = scalar_lea.vmem %s7, %s485
        // Predicated region
        $region65: #{tpu_custom_call.1} parent=47 // pred_check
          %p487 = pneg %p193
        $region66: #{tpu_custom_call.1} parent=47 // pred_check_branch
          %489 = sbr.rel (%p487) target = $region68
        $region67: #{tpu_custom_call.1} parent=47 // pred_region
          _
        $region68: #{tpu_custom_call.1} parent=47 // pred_fallthru
          _
      $region48: #{tpu_custom_call.1} parent=5 // pred_fallthru
        _
      %p490 = scmp.le.s32.totalorder 2, %s18
      // Predicated region
      $region69: #{tpu_custom_call.1} parent=5 // pred_check
        %p491 = pneg %p490
      $region70: #{tpu_custom_call.1} parent=5 // pred_check_branch
        %493 = sbr.rel (%p491) target = $region72
      $region71: #{tpu_custom_call.1} parent=5 // pred_region
        %s494 = ssub.s32 %s18, 2
        // Predicated region
        $region73: #{tpu_custom_call.1} parent=71 // pred_check
          %p495 = pneg %p199
        $region74: #{tpu_custom_call.1} parent=71 // pred_check_branch
          %497 = sbr.rel (%p495) target = $region76
        $region75: #{tpu_custom_call.1} parent=71 // pred_region
          %p498 = scmp.lt.s32.totalorder %s24, 1
          %s499 = scalar_select %p498, %s24, 1
          %s500 = smul.addr %s499, 8
          %s501 = scalar_lea.vmem %s7, %s500
        $region76: #{tpu_custom_call.1} parent=71 // pred_fallthru
          _
      $region72: #{tpu_custom_call.1} parent=5 // pred_fallthru
        _
    $region6: #{tpu_custom_call.1} parent=1 // loop_footer
      %s22 = sadd.s32 1, %s18
    $region7: #{tpu_custom_call.1} parent=1 // loop_footer_branch
      %17 = sbr.rel target = $region3
    $region8: #{tpu_custom_call.1} parent=1 // loop_exit
      _
    %502 = vsyncpa [#allocation3], 1
    %s503 = scalar_lea.sflag [#allocation3], 1
    %504 = vsyncpa %s503, 1
    %505 = vsyncpa [#allocation5], 1
    %506 = vsyncpa [#allocation8], 1

</llo_original>
